<compile_context>
chip_gen: v7x
topology: tpu7x:2x2x1
jax: 0.10.0
libtpu: 0.0.40
codegen_flags: <defaults>
</compile_context>

<pallas_src>
import math

import jax
import jax.numpy as jnp
from jax import lax
from jax.experimental import pallas as pl
from jax.experimental.pallas import tpu as pltpu


# --------------------------------------------------------------------------- kernels
def _embed_kernel_fused(x_ref, w_ref, b_ref, s_ref, v_ref):
    # x: (TILE_N, init_size)              VMEM tile of atoms
    # w: (feat_dim, init_size)            resident (PyTorch nn.Linear layout)
    # b: (1, feat_dim)                    resident
    # s: (TILE_N, feat_dim)               out
    # v: (TILE_N*feat_dim*3/128, 128)     out, zero-filled with dense 128-lane stores
    s = lax.dot_general(
        x_ref[...], w_ref[...],
        dimension_numbers=(((1,), (1,)), ((), ())),   # contract init_size of both
        preferred_element_type=jnp.float32,
    ) + b_ref[...]
    s_ref[...] = s.astype(s_ref.dtype)
    v_ref[...] = jnp.zeros_like(v_ref)


def _embed_kernel_s_only(x_ref, w_ref, b_ref, s_ref):
    s = lax.dot_general(
        x_ref[...], w_ref[...],
        dimension_numbers=(((1,), (1,)), ((), ())),
        preferred_element_type=jnp.float32,
    ) + b_ref[...]
    s_ref[...] = s.astype(s_ref.dtype)


# --------------------------------------------------------------------------- helpers
def _round_up(x, m):
    return ((x + m - 1) // m) * m


def _choose_tile(n, tile_n, align, *, target_steps=8, min_tile=512):
    """Row tile: full array for small n, else ~target_steps aligned tiles."""
    single_cap = min(2 * min_tile, tile_n)
    if n <= single_cap:
        return n                                   # grid=(1,), blocks == full dims
    cap = max(align, (tile_n // align) * align)
    t = max(min_tile, -(-n // target_steps))       # cdiv(n, target_steps)
    t = _round_up(t, align)
    t = min(t, cap)
    # Prefer an even number of tiles (v7x megacore: one stream per TensorCore).
    steps = -(-n // t)
    if steps > 1 and steps % 2 == 1:
        t2 = _round_up(-(-n // (steps + 1)), align)
        if 0 < t2 <= cap and (-(-n // t2)) % 2 == 0:
            t = t2
    return t


# --------------------------------------------------------------------------- wrapper
def new_embedding_block(init_vec, weight, bias, num_atoms, feat_dim, *,
                        tile_n=8192, vmem_limit_bytes=40 << 20):
    """Pallas implementation of NewEmbeddingBlock.forward.

    init_vec: (num_atoms, init_size) float32
    weight:   (feat_dim, init_size)  float32  (PyTorch nn.Linear layout, NOT transposed)
    bias:     (feat_dim,)            float32
    returns:  (s_i, v_i) with shapes (num_atoms, feat_dim), (num_atoms, feat_dim, 3)
    """
    n, init_size = init_vec.shape
    b2 = bias.reshape(1, feat_dim)
    v_elems = feat_dim * 3

    # Fused, lane-dense v output is only possible if the flat (n*feat_dim*3) zeros
    # reshape exactly into 128-wide rows.
    fuse_v = (num_atoms == n) and ((n * v_elems) % 128 == 0)

    align = 8                                        # f32 sublane multiple
    if fuse_v:
        # tile*v_elems must be a multiple of 8*128 so the flat-v block rows are a
        # multiple of 8 (unless the block equals the full array, i.e. single tile).
        align = (align * ((8 * 128) // math.gcd(v_elems, 8 * 128))
                 // math.gcd(align, (8 * 128) // math.gcd(v_elems, 8 * 128)))

    tile = _choose_tile(n, tile_n, align)
    if fuse_v and tile != n and (tile * v_elems) % (8 * 128) != 0:
        # Could not form an aligned lane-dense v block at this tile size; fall back.
        fuse_v = False
        tile = _choose_tile(n, tile_n, 8)

    grid = (pl.cdiv(n, tile),)

    in_specs = [
        pl.BlockSpec((tile, init_size), lambda i: (i, 0)),        # atom tile
        pl.BlockSpec((feat_dim, init_size), lambda i: (0, 0)),    # resident weight
        pl.BlockSpec((1, feat_dim), lambda i: (0, 0)),            # resident bias
    ]
    s_spec = pl.BlockSpec((tile, feat_dim), lambda i: (i, 0))
    s_shape = jax.ShapeDtypeStruct((n, feat_dim), init_vec.dtype)

    bytes_io = 4 * (n * init_size + n * feat_dim + feat_dim * init_size + feat_dim)
    if fuse_v:
        bytes_io += 4 * n * v_elems
    cost = pl.CostEstimate(flops=2 * n * init_size * feat_dim,
                           transcendentals=0,
                           bytes_accessed=bytes_io)
    cparams = pltpu.CompilerParams(
        dimension_semantics=("parallel",),            # megacore sharding on v7x
        vmem_limit_bytes=vmem_limit_bytes,
    )

    if fuse_v:
        v_rows = (n * v_elems) // 128
        v_block_rows = (tile * v_elems) // 128
        out_shape = (s_shape,
                     jax.ShapeDtypeStruct((v_rows, 128), init_vec.dtype))
        out_specs = (s_spec,
                     pl.BlockSpec((v_block_rows, 128), lambda i: (i, 0)))
        s_i, v_flat = pl.pallas_call(
            _embed_kernel_fused,
            out_shape=out_shape,
            grid=grid,
            in_specs=in_specs,
            out_specs=out_specs,
            compiler_params=cparams,
            cost_estimate=cost,
        )(init_vec, weight, b2)
        v_i = v_flat.reshape(num_atoms, feat_dim, 3)   # contiguous, all-zero reshape
    else:
        s_i = pl.pallas_call(
            _embed_kernel_s_only,
            out_shape=s_shape,
            grid=grid,
            in_specs=in_specs,
            out_specs=s_spec,
            compiler_params=cparams,
            cost_estimate=cost,
        )(init_vec, weight, b2)
        # num_atoms != rows or lane-dense layout impossible: plain XLA fill.
        v_i = jnp.zeros((num_atoms, feat_dim, 3), dtype=s_i.dtype)

    return s_i, v_i


# --------------------------------------------------------------------------- test
if __name__ == "__main__":
    init_size = 16
    feat_dim = 32

    key = jax.random.PRNGKey(0)
    k_x, k_w, k_b = jax.random.split(key, 3)

    weight = jax.random.normal(k_w, (feat_dim, init_size), dtype=jnp.float32) * 0.1
    bias = jax.random.normal(k_b, (feat_dim,), dtype=jnp.float32) * 0.1

    # 1) Small fused case (single tile, lane-dense v output).
    num_atoms = 8
    init_vec = jax.random.normal(k_x, (num_atoms, init_size), dtype=jnp.float32)
    s_i, v_i = new_embedding_block(init_vec, weight, bias, num_atoms, feat_dim)
    jax.block_until_ready((s_i, v_i))
    s_ref = init_vec @ weight.T + bias
    assert s_i.shape == (num_atoms, feat_dim)
    assert v_i.shape == (num_atoms, feat_dim, 3)
    assert jnp.allclose(s_i, s_ref, atol=1e-5, rtol=1e-5)
    assert bool(jnp.all(v_i == 0.0))

    # 2) Multi-tile path (grid > 1, partial last tile) via a small tile_n.
    n2 = 72
    init_vec2 = jax.random.normal(jax.random.fold_in(key, 1), (n2, init_size),
                                  dtype=jnp.float32)
    s2, v2 = new_embedding_block(init_vec2, weight, bias, n2, feat_dim, tile_n=32)
    jax.block_until_ready((s2, v2))
    s2_ref = init_vec2 @ weight.T + bias
    assert s2.shape == (n2, feat_dim)
    assert v2.shape == (n2, feat_dim, 3)
    assert jnp.allclose(s2, s2_ref, atol=1e-5, rtol=1e-5)
    assert bool(jnp.all(v2 == 0.0))

    # 3) Fallback path: n*feat_dim*3 not divisible by 128 (n % 4 != 0).
    n3 = 10
    init_vec3 = jax.random.normal(jax.random.fold_in(key, 2), (n3, init_size),
                                  dtype=jnp.float32)
    s3, v3 = new_embedding_block(init_vec3, weight, bias, n3, feat_dim)
    jax.block_until_ready((s3, v3))
    s3_ref = init_vec3 @ weight.T + bias
    assert s3.shape == (n3, feat_dim)
    assert v3.shape == (n3, feat_dim, 3)
    assert jnp.allclose(s3, s3_ref, atol=1e-5, rtol=1e-5)
    assert bool(jnp.all(v3 == 0.0))

    print("KERNEL_OK")
</pallas_src>

<mosaic_0001>
module attributes {stable_mosaic.version = 11 : i64} {
  func.func @_embed_kernel_fused(%arg0: i32, %arg1: memref<8x16xf32, #tpu.memory_space<vmem>>, %arg2: memref<32x16xf32, #tpu.memory_space<vmem>>, %arg3: memref<1x32xf32, #tpu.memory_space<vmem>>, %arg4: memref<8x32xf32, #tpu.memory_space<vmem>>, %arg5: memref<6x128xf32, #tpu.memory_space<vmem>>) attributes {dimension_semantics = [#tpu.dimension_semantics<parallel>], iteration_bounds = array<i64: 1>, scalar_prefetch = 0 : i64, scratch_operands = 0 : i64, tpu.core_type = #tpu.core_type<tc>, window_params = [{transform_indices = @transform_0, window_bounds = array<i64: 8, 16>}, {pipeline_mode = #tpu.pipeline_mode<synchronous>, transform_indices = @transform_1, window_bounds = array<i64: 32, 16>}, {pipeline_mode = #tpu.pipeline_mode<synchronous>, transform_indices = @transform_2, window_bounds = array<i64: 1, 32>}, {transform_indices = @transform_3, window_bounds = array<i64: 8, 32>}, {transform_indices = @transform_4, window_bounds = array<i64: 6, 128>}]} {
    %c0 = arith.constant 0 : index
    %c0_0 = arith.constant 0 : index
    %0 = vector.load %arg1[%c0, %c0_0] : memref<8x16xf32, #tpu.memory_space<vmem>>, vector<8x16xf32>
    %c0_1 = arith.constant 0 : index
    %c0_2 = arith.constant 0 : index
    %1 = vector.load %arg2[%c0_1, %c0_2] : memref<32x16xf32, #tpu.memory_space<vmem>>, vector<32x16xf32>
    %cst = arith.constant dense<0.000000e+00> : vector<8x32xf32>
    %2 = tpu.matmul %0, %1, %cst {dimension_numbers = #tpu.dot_dimension_numbers<[1], [1], [0], [0], [0, 0, 1, 0], [], []>} : vector<8x16xf32>, vector<32x16xf32>, vector<8x32xf32> -> vector<8x32xf32>
    %c0_3 = arith.constant 0 : index
    %c0_4 = arith.constant 0 : index
    %3 = vector.load %arg3[%c0_3, %c0_4] : memref<1x32xf32, #tpu.memory_space<vmem>>, vector<1x32xf32>
    %4 = vector.broadcast %3 : vector<1x32xf32> to vector<8x32xf32>
    %5 = arith.addf %2, %4 : vector<8x32xf32>
    %c0_5 = arith.constant 0 : index
    %c0_6 = arith.constant 0 : index
    %6 = vector.load %arg4[%c0_5, %c0_6] : memref<8x32xf32, #tpu.memory_space<vmem>>, vector<8x32xf32>
    tpu.vector_store %arg4[%c0_5, %c0_6], %5 {strides = array<i32>} : memref<8x32xf32, #tpu.memory_space<vmem>>, vector<8x32xf32>,
    %cst_7 = arith.constant 0.000000e+00 : f32
    %7 = vector.broadcast %cst_7 : f32 to vector<6x128xf32>
    %c0_8 = arith.constant 0 : index
    %c0_9 = arith.constant 0 : index
    %8 = vector.load %arg5[%c0_8, %c0_9] : memref<6x128xf32, #tpu.memory_space<vmem>>, vector<6x128xf32>
    tpu.vector_store %arg5[%c0_8, %c0_9], %7 {strides = array<i32>} : memref<6x128xf32, #tpu.memory_space<vmem>>, vector<6x128xf32>,
    return
  }
  func.func @transform_0(%arg0: i32) -> (i32, i32) {
    %c0_i32 = arith.constant 0 : i32
    %c0_i32_0 = arith.constant 0 : i32
    return %arg0, %c0_i32 : i32, i32
  }
  func.func @transform_1(%arg0: i32) -> (i32, i32) {
    %c0_i32 = arith.constant 0 : i32
    %c0_i32_0 = arith.constant 0 : i32
    %c0_i32_1 = arith.constant 0 : i32
    return %c0_i32, %c0_i32_0 : i32, i32
  }
  func.func @transform_2(%arg0: i32) -> (i32, i32) {
    %c0_i32 = arith.constant 0 : i32
    %c0_i32_0 = arith.constant 0 : i32
    %c0_i32_1 = arith.constant 0 : i32
    return %c0_i32, %c0_i32_0 : i32, i32
  }
  func.func @transform_3(%arg0: i32) -> (i32, i32) {
    %c0_i32 = arith.constant 0 : i32
    %c0_i32_0 = arith.constant 0 : i32
    return %arg0, %c0_i32 : i32, i32
  }
  func.func @transform_4(%arg0: i32) -> (i32, i32) {
    %c0_i32 = arith.constant 0 : i32
    %c0_i32_0 = arith.constant 0 : i32
    return %arg0, %c0_i32 : i32, i32
  }
}

</mosaic_0001>

<llo_original>
// kernel: tpu_custom_call.1
$region0: #{tpu_custom_call.1}
  #allocation0 [shape = 'u32[]', space=smem, size = 0x4, offset = 0x4, fixed_abs, tag = 'smem constant byte address 0x4 - core index']
  #allocation1 [shape = 'u32[144,128]{1,0:T(1,128)}', space=vmem, size = 0x12000, scoped, tag = 'internal scratch']
  %s0 = inlined_call_operand.vmem [shape: f32[8,16], index: 0, kind: input, shape index: {}]
  %s1 = inlined_call_operand.vmem [shape: f32[32,16], index: 1, kind: input, shape index: {}]
  %s2 = inlined_call_operand.vmem [shape: f32[1,32], index: 2, kind: input, shape index: {}]
  %s3 = inlined_call_operand.hbm [shape: f32[8,32], index: 3, kind: output, shape index: {0}]
  %s4 = inlined_call_operand.hbm [shape: f32[6,128], index: 4, kind: output, shape index: {1}]
  %5 = xla_tuple %s3, %s4
  %s6 = sld [smem:[#allocation0]]
  $region30: #{tpu_custom_call.1} parent=0
    _
  %s8 = ssub.s32 1, %s6
  %s9 = scalar_select 0, %s8, %s6
  $region1: #{tpu_custom_call.1} parent=0
    #allocation2 [shape = 'u8[4096]{0}', space=vmem, size = 0x1000, scoped, tag = 'output window, operand 0, single buffered']
    #allocation3 [shape = 's32[1]{0}', space=sflag, size = 0x4, scoped, tag = 'scoped memory for tpu_custom_call.1']
    #allocation4 [shape = 'u8[4096]{0}', space=vmem, size = 0x1000, scoped, tag = 'output window, operand 1, single buffered']
    #allocation5 [shape = 's32[1]{0}', space=sflag, size = 0x4, scoped, tag = 'scoped memory for tpu_custom_call.1']
    %10 = vsyncpa [#allocation3], 0
    %11 = vsyncpa [#allocation5], 0
    // Predicated region
    $region2: #{tpu_custom_call.1} parent=1 // pred_check
      _
    $region3: #{tpu_custom_call.1} parent=1 // pred_check_branch
      %13 = sbr.rel (0) target = $region5
    $region4: #{tpu_custom_call.1} parent=1 // pred_region
      _
    $region5: #{tpu_custom_call.1} parent=1 // pred_fallthru
      _
    // Predicated region
    $region6: #{tpu_custom_call.1} parent=1 // pred_check
      _
    $region7: #{tpu_custom_call.1} parent=1 // pred_check_branch
      %15 = sbr.rel (0) target = $region9
    $region8: #{tpu_custom_call.1} parent=1 // pred_region
      _
    $region9: #{tpu_custom_call.1} parent=1 // pred_fallthru
      _
    // Predicated region
    $region10: #{tpu_custom_call.1} parent=1 // pred_check
      _
    $region11: #{tpu_custom_call.1} parent=1 // pred_check_branch
      %17 = sbr.rel (0) target = $region13
    $region12: #{tpu_custom_call.1} parent=1 // pred_region
      _
    $region13: #{tpu_custom_call.1} parent=1 // pred_fallthru
      _
    %v18 = vld [vmem:[%s0] sm:$0xff]
    %v19 = vld [vmem:[%s1] sm:$0xff]
    %v20 = vld [vmem:[%s1 + $0x8] sm:$0xff]
    %v21 = vld [vmem:[%s1 + $0x10] sm:$0xff]
    %v22 = vld [vmem:[%s1 + $0x18] sm:$0xff]
    %v23 = vld [vmem:[%s2] sm:$0x1]
    %v25 = vlaneseq
    %v26 = vshrl.u32 %v25, 7
    %v27 = vsub.s32 0, %v26
    %v28 = vrot.slane %v23, %v27
    %vm30 = vcmask 130048
    %v32 = vsel %vm30, %v18, 0
    %v35 = vsel %vm30, %v19, 0
    %v38 = vsel %vm30, %v20, 0
    %v41 = vsel %vm30, %v21, 0
    %v44 = vsel %vm30, %v22, 0
    %46 = vmatprep.subr.mxu0 0.0
    %47 = vmatpush1.xpose.msra.mxu0 %v35
    %48 = vmatprep.subr.mxu0 0.0
    %49 = vmatpush1.xpose.msra.mxu0 %v38
    %50 = vmatprep.subr.mxu0 0.0
    %51 = vmatpush1.xpose.msra.mxu0 %v41
    %52 = vmatprep.subr.mxu0 0.0
    %53 = vmatpush1.xpose.msra.mxu0 %v44
    %54 = vmatprep.subr.mxu0 0.0
    %55 = vmatpush1.xpose.msra.mxu0 0.0
    %56 = vmatprep.subr.mxu0 0.0
    %57 = vmatpush1.xpose.msra.mxu0 0.0
    %58 = vmatprep.subr.mxu0 0.0
    %59 = vmatpush1.xpose.msra.mxu0 0.0
    %60 = vmatprep.subr.mxu0 0.0
    %61 = vmatpush1.xpose.msra.mxu0 0.0
    %62 = vmatprep.subr.mxu0 0.0
    %63 = vmatpush1.xpose.msra.mxu0 0.0
    %64 = vmatprep.subr.mxu0 0.0
    %65 = vmatpush1.xpose.msra.mxu0 0.0
    %66 = vmatprep.subr.mxu0 0.0
    %67 = vmatpush1.xpose.msra.mxu0 0.0
    %68 = vmatprep.subr.mxu0 0.0
    %69 = vmatpush1.xpose.msra.mxu0 0.0
    %70 = vmatprep.subr.mxu0 0.0
    %71 = vmatpush1.xpose.msra.mxu0 0.0
    %72 = vmatprep.subr.mxu0 0.0
    %73 = vmatpush1.xpose.msra.mxu0 0.0
    %74 = vmatprep.subr.mxu0 0.0
    %75 = vmatpush1.xpose.msra.mxu0 0.0
    %76 = vmatprep.subr.mxu0 0.0
    %77 = vmatpush1.xpose.msra.mxu0 0.0
    %78 = vmatprep.subr.mxu0 0.0
    %79 = vmatpush1.xpose.msra.mxu0 0.0
    %80 = vmatprep.subr.mxu0 0.0
    %81 = vmatpush1.xpose.msra.mxu0 0.0
    %82 = vmatprep.subr.mxu0 0.0
    %83 = vmatpush1.xpose.msra.mxu0 0.0
    %84 = vmatprep.subr.mxu0 0.0
    %85 = vmatpush1.xpose.msra.mxu0 0.0
    %86 = vmatprep.subr.mxu0 0.0
    %87 = vmatpush1.xpose.msra.mxu0 0.0
    %88 = vmatprep.subr.mxu0 0.0
    %89 = vmatpush1.xpose.msra.mxu0 0.0
    %90 = vmatprep.subr.mxu0 0.0
    %91 = vmatpush1.xpose.msra.mxu0 0.0
    %92 = vmatprep.subr.mxu0 0.0
    %93 = vmatpush1.xpose.msra.mxu0 0.0
    %94 = vmatprep.subr.mxu0 0.0
    %95 = vmatpush1.xpose.msra.mxu0 0.0
    %96 = vmatprep.subr.mxu0 0.0
    %97 = vmatpush1.xpose.msra.mxu0 0.0
    %98 = vmatprep.subr.mxu0 0.0
    %99 = vmatpush1.xpose.msra.mxu0 0.0
    %100 = vmatprep.subr.mxu0 0.0
    %101 = vmatpush1.xpose.msra.mxu0 0.0
    %102 = vmatprep.subr.mxu0 0.0
    %103 = vmatpush1.xpose.msra.mxu0 0.0
    %104 = vmatprep.subr.mxu0 0.0
    %105 = vmatpush1.xpose.msra.mxu0 0.0
    %106 = vmatprep.subr.mxu0 0.0
    %107 = vmatpush1.xpose.msra.mxu0 0.0
    %108 = vmatprep.subr.mxu0 0.0
    %109 = vmatpush1.xpose.msra.mxu0 0.0
    %110 = vmatprep.mubr.f32.mxu0 0.0
    %111 = vmatmul.mubr.f32.gmra.mrb[0].mxu0 %v32
    %v112 = vpop.f32.mrb[0].mxu0
    %v113 = vadd.f32 %v28, %v112
    %v114 = vpop.f32.mrb[0].mxu0
    %115 = vdwg.mxu0
    %vm116 = vcmask 261120
    %117 = vst.msk [vmem:[#allocation2] sm:$0xff] %vm116, %v113
    %118 = vst [vmem:[#allocation4] sm:$0x3f] 0.0
    // Predicated region
    $region14: #{tpu_custom_call.1} parent=1 // pred_check
      _
    $region15: #{tpu_custom_call.1} parent=1 // pred_check_branch
      %120 = sbr.rel (0) target = $region17
    $region16: #{tpu_custom_call.1} parent=1 // pred_region
      %s122 = ssub.s32 128, 128
      %123 = vsyncadd [#allocation3], %s122
      %s125 = sshll.u32 [#allocation2], 4
      %s126 = int_to_ptr.vmem [resolvable:$true] %s125
      %128 = dma.vmem_to_hbm [thread:$0]  %s126, 128, %s3, [#allocation3]
    $region17: #{tpu_custom_call.1} parent=1 // pred_fallthru
      _
    // Predicated region
    $region18: #{tpu_custom_call.1} parent=1 // pred_check
      _
    $region19: #{tpu_custom_call.1} parent=1 // pred_check_branch
      %130 = sbr.rel (0) target = $region21
    $region20: #{tpu_custom_call.1} parent=1 // pred_region
      %s132 = ssub.s32 128, 128
      %133 = vsyncadd [#allocation5], %s132
      %s135 = sshll.u32 [#allocation4], 4
      %s136 = int_to_ptr.vmem [resolvable:$true] %s135
      %138 = dma.vmem_to_hbm [thread:$0]  %s136, 128, %s4, [#allocation5]
    $region21: #{tpu_custom_call.1} parent=1 // pred_fallthru
      _
    // Predicated region
    $region22: #{tpu_custom_call.1} parent=1 // pred_check
      _
    $region23: #{tpu_custom_call.1} parent=1 // pred_check_branch
      %140 = sbr.rel (0) target = $region25
    $region24: #{tpu_custom_call.1} parent=1 // pred_region
      %141 = dma.done [#allocation3], 128
    $region25: #{tpu_custom_call.1} parent=1 // pred_fallthru
      _
    // Predicated region
    $region26: #{tpu_custom_call.1} parent=1 // pred_check
      _
    $region27: #{tpu_custom_call.1} parent=1 // pred_check_branch
      %143 = sbr.rel (0) target = $region29
    $region28: #{tpu_custom_call.1} parent=1 // pred_region
      %144 = dma.done [#allocation5], 128
    $region29: #{tpu_custom_call.1} parent=1 // pred_fallthru
      _
    %145 = vsyncpa [#allocation3], 1
    %146 = vsyncpa [#allocation5], 1

</llo_original>
